<compile_context>
chip_gen: v7x
topology: tpu7x:2x2x1
jax: 0.10.0
libtpu: 0.0.40
codegen_flags: <defaults>
</compile_context>

<pallas_src>
import functools

import jax
import jax.numpy as jnp
from jax.experimental import pallas as pl
from jax.experimental.pallas import tpu as pltpu

EPS = 1e-3
_CORE_SPLIT = 2  # leading "parallel" grid axis for pass 1 (megacore on v7x)


def _round_up(x, m):
    return (x + m - 1) // m * m


# ---------------- pass 1: conv matmul + per-channel partial batch statistics ----------------

def _conv_stats_kernel(p_ref, w_ref, y_ref, sum_ref, sumsq_ref):
    # p_ref: (TM, Kp) bf16   w_ref: (Kp, Cp) bf16   y_ref: (TM, Cp) f32
    # sum_ref / sumsq_ref: (8, Cp) f32 per-core-slice accumulators (grid-resident).
    @pl.when(pl.program_id(1) == 0)
    def _init():
        sum_ref[...] = jnp.zeros_like(sum_ref)
        sumsq_ref[...] = jnp.zeros_like(sumsq_ref)

    y = jnp.dot(p_ref[...], w_ref[...], preferred_element_type=jnp.float32)
    y_ref[...] = y
    # (1, Cp) partials broadcast-added over the 8 sublane rows (every row holds the same
    # value; the wrapper reads one row per core-slice and sums them).
    sum_ref[...] = sum_ref[...] + jnp.sum(y, axis=0, keepdims=True)
    sumsq_ref[...] = sumsq_ref[...] + jnp.sum(y * y, axis=0, keepdims=True)


# ---------------- pass 2: fused (folded) BN scale/shift + ReLU ----------------

def _bn_relu_kernel(y_ref, scale_ref, shift_ref, o_ref):
    o_ref[...] = jnp.maximum(
        y_ref[...] * scale_ref[...] + shift_ref[...], 0.0
    ).astype(o_ref.dtype)


@functools.partial(jax.jit, static_argnames=("stride", "padding", "tile_m"))
def basic_conv2d(x_nchw, weight_oihw, gamma, beta, *, stride=1, padding=0, tile_m=512):
    """Conv2d(bias=False) + BatchNorm2d(training-mode batch stats, eps=1e-3) + ReLU.

    x_nchw:      (N, Cin, H, W) float32
    weight_oihw: (Cout, Cin, KH, KW)
    gamma, beta: (Cout,)
    returns:     (N, Cout, OH, OW) float32
    """
    N, Cin, H, W = x_nchw.shape
    Cout, _, KH, KW = weight_oihw.shape
    OH = (H + 2 * padding - KH) // stride + 1
    OW = (W + 2 * padding - KW) // stride + 1

    M = N * OH * OW
    K = KH * KW * Cin
    Kp = _round_up(K, 128)      # lane-dense / full MXU columns
    Cp = _round_up(Cout, 128)   # unmasked vst on the output

    # M tile: biggest tile that fits comfortably in scoped VMEM and splits evenly
    # across the core-split axis.
    tm = min(tile_m, _round_up(pl.cdiv(M, _CORE_SPLIT), 8))

    def _p1_bytes(t):  # double-buffered working set of pass 1
        return 2 * (t * Kp * 2 + Kp * Cp * 2 + t * Cp * 4 + 2 * 8 * Cp * 4)

    while tm > 8 and _p1_bytes(tm) > (24 << 20):
        tm = max(8, _round_up(tm // 2, 8))

    Mp = _round_up(M, _CORE_SPLIT * tm)
    tpc = Mp // (_CORE_SPLIT * tm)   # M tiles per core-split slice
    n_tiles = Mp // tm

    # ---- glue: im2col in plain JAX (NCHW -> NHWC -> (M, K) patches), kept in bf16 ----
    # TODO(synk): fuse im2col into the kernel (overlapping NHWC row tiles via BlockSpec,
    # kh/kw expansion on VMEM-resident data) to avoid the KH*KW x HBM patch blow-up.
    x_nhwc = jnp.transpose(x_nchw, (0, 2, 3, 1)).astype(jnp.bfloat16)
    x_pad = jnp.pad(x_nhwc, ((0, 0), (padding, padding), (padding, padding), (0, 0)))
    cols = []
    for kh in range(KH):
        for kw in range(KW):
            cols.append(
                x_pad[:, kh:kh + stride * OH:stride, kw:kw + stride * OW:stride, :]
            )
    # patch feature order is (kh, kw, cin) to match the weight reshape below
    patches = jnp.concatenate(cols, axis=-1).reshape(M, K)
    patches_p = jnp.pad(patches, ((0, Mp - M), (0, Kp - K)))

    # weight (Cout, Cin, KH, KW) -> (KH, KW, Cin, Cout) -> (K, Cout) -> padded (Kp, Cp)
    w_mat = jnp.transpose(weight_oihw, (2, 3, 1, 0)).reshape(K, Cout).astype(jnp.bfloat16)
    w_p = jnp.pad(w_mat, ((0, Kp - K), (0, Cp - Cout)))

    vmem_p1 = int(min(max(_p1_bytes(tm) + (2 << 20), 4 << 20), 32 << 20))

    y_full, part_sum, part_sumsq = pl.pallas_call(
        _conv_stats_kernel,
        out_shape=(
            jax.ShapeDtypeStruct((Mp, Cp), jnp.float32),
            jax.ShapeDtypeStruct((_CORE_SPLIT * 8, Cp), jnp.float32),
            jax.ShapeDtypeStruct((_CORE_SPLIT * 8, Cp), jnp.float32),
        ),
        grid_spec=pltpu.PrefetchScalarGridSpec(
            num_scalar_prefetch=0,
            grid=(_CORE_SPLIT, tpc),
            in_specs=[
                pl.BlockSpec((tm, Kp), lambda c, i: (c * tpc + i, 0)),
                pl.BlockSpec((Kp, Cp), lambda c, i: (0, 0)),
            ],
            out_specs=(
                pl.BlockSpec((tm, Cp), lambda c, i: (c * tpc + i, 0)),
                pl.BlockSpec((8, Cp), lambda c, i: (c, 0)),
                pl.BlockSpec((8, Cp), lambda c, i: (c, 0)),
            ),
        ),
        compiler_params=pltpu.CompilerParams(
            # outer axis independent -> both TCs on v7x; inner axis carries accumulators
            dimension_semantics=("parallel", "arbitrary"),
            vmem_limit_bytes=vmem_p1,
        ),
        cost_estimate=pl.CostEstimate(
            flops=2 * Mp * Kp * Cp + 4 * Mp * Cp,
            transcendentals=0,
            bytes_accessed=Mp * Kp * 2 + Kp * Cp * 2 + Mp * Cp * 4
            + 2 * _CORE_SPLIT * 8 * Cp * 4,
        ),
    )(patches_p, w_p)

    # ---- fold BN (training-mode batch stats, biased variance) into scale/shift ----
    m_true = jnp.float32(M)
    ch_sum = jnp.sum(part_sum[0::8, :], axis=0, keepdims=True)        # (1, Cp)
    ch_sumsq = jnp.sum(part_sumsq[0::8, :], axis=0, keepdims=True)    # (1, Cp)
    mean = ch_sum / m_true
    var = jnp.maximum(ch_sumsq / m_true - mean * mean, 0.0)
    gamma_p = jnp.pad(gamma.astype(jnp.float32).reshape(1, Cout), ((0, 0), (0, Cp - Cout)))
    beta_p = jnp.pad(beta.astype(jnp.float32).reshape(1, Cout), ((0, 0), (0, Cp - Cout)))
    scale = gamma_p * jax.lax.rsqrt(var + EPS)
    shift = beta_p - mean * scale

    vmem_p2 = int(min(max(2 * (2 * tm * Cp * 4 + 2 * Cp * 4) + (2 << 20), 4 << 20), 32 << 20))

    out_flat = pl.pallas_call(
        _bn_relu_kernel,
        out_shape=jax.ShapeDtypeStruct((Mp, Cp), jnp.float32),
        grid_spec=pltpu.PrefetchScalarGridSpec(
            num_scalar_prefetch=0,
            grid=(n_tiles,),
            in_specs=[
                pl.BlockSpec((tm, Cp), lambda i: (i, 0)),
                pl.BlockSpec((1, Cp), lambda i: (0, 0)),
                pl.BlockSpec((1, Cp), lambda i: (0, 0)),
            ],
            out_specs=pl.BlockSpec((tm, Cp), lambda i: (i, 0)),
        ),
        compiler_params=pltpu.CompilerParams(
            dimension_semantics=("parallel",),   # independent tiles -> both TCs on v7x
            vmem_limit_bytes=vmem_p2,
        ),
        input_output_aliases={0: 0},             # reuse the y intermediate in place
        cost_estimate=pl.CostEstimate(
            flops=3 * Mp * Cp,
            transcendentals=0,
            bytes_accessed=2 * Mp * Cp * 4 + 2 * Cp * 4,
        ),
    )(y_full, scale, shift)

    # (Mp, Cp) -> strip padding -> (N, OH, OW, Cout) -> NCHW
    out = out_flat[:M, :Cout].reshape(N, OH, OW, Cout)
    return jnp.transpose(out, (0, 3, 1, 2))


def _reference(x_nchw, weight_oihw, gamma, beta, *, stride=1, padding=0,
               matmul_dtype=jnp.float32):
    y = jax.lax.conv_general_dilated(
        x_nchw.astype(matmul_dtype), weight_oihw.astype(matmul_dtype),
        window_strides=(stride, stride),
        padding=[(padding, padding), (padding, padding)],
        dimension_numbers=("NCHW", "OIHW", "NCHW"),
        preferred_element_type=jnp.float32,
    )
    mean = jnp.mean(y, axis=(0, 2, 3), keepdims=True)
    var = jnp.mean(jnp.square(y - mean), axis=(0, 2, 3), keepdims=True)
    y = (y - mean) * jax.lax.rsqrt(var + EPS)
    y = y * gamma.reshape(1, -1, 1, 1) + beta.reshape(1, -1, 1, 1)
    return jnp.maximum(y, 0.0)


if __name__ == "__main__":
    # BasicConv2d(in_planes=4, out_planes=8, kernel_size=3, stride=1, padding=1)
    N, Cin, H, W = 2, 4, 16, 16
    Cout, KH, KW = 8, 3, 3
    stride, padding = 1, 1

    key = jax.random.PRNGKey(0)
    k_x, k_w = jax.random.split(key)
    x = jax.random.normal(k_x, (N, Cin, H, W), dtype=jnp.float32)
    weight = jax.random.normal(k_w, (Cout, Cin, KH, KW), dtype=jnp.float32) * 0.1
    gamma = jnp.ones((Cout,), dtype=jnp.float32)   # PyTorch BN affine defaults
    beta = jnp.zeros((Cout,), dtype=jnp.float32)

    out = basic_conv2d(x, weight, gamma, beta, stride=stride, padding=padding)
    out = jax.block_until_ready(out)
    assert out.shape == (N, Cout, H, W)

    # Apples-to-apples check: reference conv also done with bf16 inputs / f32 accum
    # (matches the MXU path); BN + ReLU in f32 in both.
    ref_bf16 = _reference(x, weight, gamma, beta, stride=stride, padding=padding,
                          matmul_dtype=jnp.bfloat16)
    assert jnp.allclose(out, ref_bf16, atol=3e-3, rtol=3e-3), "mismatch vs bf16 reference"

    # Loose sanity check against the full-f32 reference (difference = bf16 input rounding).
    ref_f32 = _reference(x, weight, gamma, beta, stride=stride, padding=padding)
    assert float(jnp.max(jnp.abs(out - ref_f32))) < 0.1, "mismatch vs f32 reference"

    print("KERNEL_OK")
</pallas_src>

<mosaic_0001>
module attributes {stable_mosaic.version = 11 : i64} {
  func.func @_conv_stats_kernel(%arg0: i32, %arg1: i32, %arg2: memref<256x128xbf16, #tpu.memory_space<vmem>>, %arg3: memref<128x128xbf16, #tpu.memory_space<vmem>>, %arg4: memref<256x128xf32, #tpu.memory_space<vmem>>, %arg5: memref<8x128xf32, #tpu.memory_space<vmem>>, %arg6: memref<8x128xf32, #tpu.memory_space<vmem>>) attributes {dimension_semantics = [#tpu.dimension_semantics<parallel>, #tpu.dimension_semantics<arbitrary>], iteration_bounds = array<i64: 2, 1>, scalar_prefetch = 0 : i64, scratch_operands = 0 : i64, tpu.core_type = #tpu.core_type<tc>, window_params = [{transform_indices = @transform_0, window_bounds = array<i64: 256, 128>}, {pipeline_mode = #tpu.pipeline_mode<synchronous>, transform_indices = @transform_1, window_bounds = array<i64: 128, 128>}, {transform_indices = @transform_2, window_bounds = array<i64: 256, 128>}, {transform_indices = @transform_3, window_bounds = array<i64: 8, 128>}, {transform_indices = @transform_4, window_bounds = array<i64: 8, 128>}]} {
    %c0_i32 = arith.constant 0 : i32
    %0 = arith.cmpi eq, %arg1, %c0_i32 : i32
    %1 = arith.extui %0 : i1 to i32
    %c0_i32_0 = arith.constant 0 : i32
    %2 = arith.cmpi ne, %1, %c0_i32_0 : i32
    scf.if %2 {
      %cst_16 = arith.constant 0.000000e+00 : f32
      %20 = vector.broadcast %cst_16 : f32 to vector<8x128xf32>
      %c0_17 = arith.constant 0 : index
      %c0_18 = arith.constant 0 : index
      %21 = vector.load %arg5[%c0_17, %c0_18] : memref<8x128xf32, #tpu.memory_space<vmem>>, vector<8x128xf32>
      tpu.vector_store %arg5[%c0_17, %c0_18], %20 {strides = array<i32>} : memref<8x128xf32, #tpu.memory_space<vmem>>, vector<8x128xf32>,
      %cst_19 = arith.constant 0.000000e+00 : f32
      %22 = vector.broadcast %cst_19 : f32 to vector<8x128xf32>
      %c0_20 = arith.constant 0 : index
      %c0_21 = arith.constant 0 : index
      %23 = vector.load %arg6[%c0_20, %c0_21] : memref<8x128xf32, #tpu.memory_space<vmem>>, vector<8x128xf32>
      tpu.vector_store %arg6[%c0_20, %c0_21], %22 {strides = array<i32>} : memref<8x128xf32, #tpu.memory_space<vmem>>, vector<8x128xf32>,
    } else {
    }
    %c0 = arith.constant 0 : index
    %c0_1 = arith.constant 0 : index
    %3 = vector.load %arg2[%c0, %c0_1] : memref<256x128xbf16, #tpu.memory_space<vmem>>, vector<256x128xbf16>
    %c0_2 = arith.constant 0 : index
    %c0_3 = arith.constant 0 : index
    %4 = vector.load %arg3[%c0_2, %c0_3] : memref<128x128xbf16, #tpu.memory_space<vmem>>, vector<128x128xbf16>
    %cst = arith.constant dense<0.000000e+00> : vector<256x128xf32>
    %5 = tpu.matmul %3, %4, %cst {dimension_numbers = #tpu.dot_dimension_numbers<[1], [0], [0], [1], [0, 0, 1, 1], [], []>} : vector<256x128xbf16>, vector<128x128xbf16>, vector<256x128xf32> -> vector<256x128xf32>
    %c0_4 = arith.constant 0 : index
    %c0_5 = arith.constant 0 : index
    %6 = vector.load %arg4[%c0_4, %c0_5] : memref<256x128xf32, #tpu.memory_space<vmem>>, vector<256x128xf32>
    tpu.vector_store %arg4[%c0_4, %c0_5], %5 {strides = array<i32>} : memref<256x128xf32, #tpu.memory_space<vmem>>, vector<256x128xf32>,
    %c0_6 = arith.constant 0 : index
    %c0_7 = arith.constant 0 : index
    %7 = vector.load %arg5[%c0_6, %c0_7] : memref<8x128xf32, #tpu.memory_space<vmem>>, vector<8x128xf32>
    %cst_8 = arith.constant dense<0.000000e+00> : vector<128xf32>
    %8 = vector.multi_reduction <add>, %5, %cst_8 [0] : vector<256x128xf32> to vector<128xf32>
    %9 = vector.shape_cast %8 : vector<128xf32> to vector<1x128xf32>
    %10 = vector.broadcast %9 : vector<1x128xf32> to vector<8x128xf32>
    %11 = arith.addf %7, %10 : vector<8x128xf32>
    %c0_9 = arith.constant 0 : index
    %c0_10 = arith.constant 0 : index
    %12 = vector.load %arg5[%c0_9, %c0_10] : memref<8x128xf32, #tpu.memory_space<vmem>>, vector<8x128xf32>
    tpu.vector_store %arg5[%c0_9, %c0_10], %11 {strides = array<i32>} : memref<8x128xf32, #tpu.memory_space<vmem>>, vector<8x128xf32>,
    %c0_11 = arith.constant 0 : index
    %c0_12 = arith.constant 0 : index
    %13 = vector.load %arg6[%c0_11, %c0_12] : memref<8x128xf32, #tpu.memory_space<vmem>>, vector<8x128xf32>
    %14 = arith.mulf %5, %5 : vector<256x128xf32>
    %cst_13 = arith.constant dense<0.000000e+00> : vector<128xf32>
    %15 = vector.multi_reduction <add>, %14, %cst_13 [0] : vector<256x128xf32> to vector<128xf32>
    %16 = vector.shape_cast %15 : vector<128xf32> to vector<1x128xf32>
    %17 = vector.broadcast %16 : vector<1x128xf32> to vector<8x128xf32>
    %18 = arith.addf %13, %17 : vector<8x128xf32>
    %c0_14 = arith.constant 0 : index
    %c0_15 = arith.constant 0 : index
    %19 = vector.load %arg6[%c0_14, %c0_15] : memref<8x128xf32, #tpu.memory_space<vmem>>, vector<8x128xf32>
    tpu.vector_store %arg6[%c0_14, %c0_15], %18 {strides = array<i32>} : memref<8x128xf32, #tpu.memory_space<vmem>>, vector<8x128xf32>,
    return
  }
  func.func @transform_0(%arg0: i32, %arg1: i32) -> (i32, i32) {
    %c1_i32 = arith.constant 1 : i32
    %0 = arith.muli %arg0, %c1_i32 : i32
    %1 = arith.addi %0, %arg1 : i32
    %c0_i32 = arith.constant 0 : i32
    %c0_i32_0 = arith.constant 0 : i32
    return %1, %c0_i32 : i32, i32
  }
  func.func @transform_1(%arg0: i32, %arg1: i32) -> (i32, i32) {
    %c0_i32 = arith.constant 0 : i32
    %c0_i32_0 = arith.constant 0 : i32
    %c0_i32_1 = arith.constant 0 : i32
    return %c0_i32, %c0_i32_0 : i32, i32
  }
  func.func @transform_2(%arg0: i32, %arg1: i32) -> (i32, i32) {
    %c1_i32 = arith.constant 1 : i32
    %0 = arith.muli %arg0, %c1_i32 : i32
    %1 = arith.addi %0, %arg1 : i32
    %c0_i32 = arith.constant 0 : i32
    %c0_i32_0 = arith.constant 0 : i32
    return %1, %c0_i32 : i32, i32
  }
  func.func @transform_3(%arg0: i32, %arg1: i32) -> (i32, i32) {
    %c0_i32 = arith.constant 0 : i32
    %c0_i32_0 = arith.constant 0 : i32
    return %arg0, %c0_i32 : i32, i32
  }
  func.func @transform_4(%arg0: i32, %arg1: i32) -> (i32, i32) {
    %c0_i32 = arith.constant 0 : i32
    %c0_i32_0 = arith.constant 0 : i32
    return %arg0, %c0_i32 : i32, i32
  }
}

module attributes {stable_mosaic.version = 11 : i64} {
  func.func @_bn_relu_kernel(%arg0: i32, %arg1: memref<256x128xf32, #tpu.memory_space<vmem>>, %arg2: memref<1x128xf32, #tpu.memory_space<vmem>>, %arg3: memref<1x128xf32, #tpu.memory_space<vmem>>, %arg4: memref<256x128xf32, #tpu.memory_space<vmem>>) attributes {dimension_semantics = [#tpu.dimension_semantics<parallel>], iteration_bounds = array<i64: 2>, scalar_prefetch = 0 : i64, scratch_operands = 0 : i64, tpu.core_type = #tpu.core_type<tc>, window_params = [{transform_indices = @transform_0, window_bounds = array<i64: 256, 128>}, {pipeline_mode = #tpu.pipeline_mode<synchronous>, transform_indices = @transform_1, window_bounds = array<i64: 1, 128>}, {pipeline_mode = #tpu.pipeline_mode<synchronous>, transform_indices = @transform_2, window_bounds = array<i64: 1, 128>}, {transform_indices = @transform_3, window_bounds = array<i64: 256, 128>}]} {
    %c0 = arith.constant 0 : index
    %c0_0 = arith.constant 0 : index
    %0 = vector.load %arg1[%c0, %c0_0] : memref<256x128xf32, #tpu.memory_space<vmem>>, vector<256x128xf32>
    %c0_1 = arith.constant 0 : index
    %c0_2 = arith.constant 0 : index
    %1 = vector.load %arg2[%c0_1, %c0_2] : memref<1x128xf32, #tpu.memory_space<vmem>>, vector<1x128xf32>
    %2 = vector.broadcast %1 : vector<1x128xf32> to vector<256x128xf32>
    %3 = arith.mulf %0, %2 : vector<256x128xf32>
    %c0_3 = arith.constant 0 : index
    %c0_4 = arith.constant 0 : index
    %4 = vector.load %arg3[%c0_3, %c0_4] : memref<1x128xf32, #tpu.memory_space<vmem>>, vector<1x128xf32>
    %5 = vector.broadcast %4 : vector<1x128xf32> to vector<256x128xf32>
    %6 = arith.addf %3, %5 : vector<256x128xf32>
    %cst = arith.constant 0.000000e+00 : f32
    %7 = vector.broadcast %cst : f32 to vector<256x128xf32>
    %8 = arith.maximumf %6, %7 : vector<256x128xf32>
    %c0_5 = arith.constant 0 : index
    %c0_6 = arith.constant 0 : index
    %9 = vector.load %arg4[%c0_5, %c0_6] : memref<256x128xf32, #tpu.memory_space<vmem>>, vector<256x128xf32>
    tpu.vector_store %arg4[%c0_5, %c0_6], %8 {strides = array<i32>} : memref<256x128xf32, #tpu.memory_space<vmem>>, vector<256x128xf32>,
    return
  }
  func.func @transform_0(%arg0: i32) -> (i32, i32) {
    %c0_i32 = arith.constant 0 : i32
    %c0_i32_0 = arith.constant 0 : i32
    return %arg0, %c0_i32 : i32, i32
  }
  func.func @transform_1(%arg0: i32) -> (i32, i32) {
    %c0_i32 = arith.constant 0 : i32
    %c0_i32_0 = arith.constant 0 : i32
    %c0_i32_1 = arith.constant 0 : i32
    return %c0_i32, %c0_i32_0 : i32, i32
  }
  func.func @transform_2(%arg0: i32) -> (i32, i32) {
    %c0_i32 = arith.constant 0 : i32
    %c0_i32_0 = arith.constant 0 : i32
    %c0_i32_1 = arith.constant 0 : i32
    return %c0_i32, %c0_i32_0 : i32, i32
  }
  func.func @transform_3(%arg0: i32) -> (i32, i32) {
    %c0_i32 = arith.constant 0 : i32
    %c0_i32_0 = arith.constant 0 : i32
    return %arg0, %c0_i32 : i32, i32
  }
}

</mosaic_0001>

<llo_original>
// kernel: basic_conv2d.3
$region0: #{basic_conv2d.3}
  #allocation0 [shape = 'u32[]', space=smem, size = 0x4, offset = 0x4, fixed_abs, tag = 'smem constant byte address 0x4 - core index']
  #allocation1 [shape = 'u32[144,128]{1,0:T(1,128)}', space=vmem, size = 0x12000, scoped, tag = 'internal scratch']
  %s0 = inlined_call_operand.vmem [shape: f32[512,128], index: 0, kind: input, shape index: {}, may-alias: {0,3}]
  %s1 = inlined_call_operand.vmem [shape: f32[1,128], index: 1, kind: input, shape index: {}]
  %s2 = inlined_call_operand.vmem [shape: f32[1,128], index: 2, kind: input, shape index: {}]
  %s3 = inlined_call_operand.vmem [shape: f32[512,128], index: 3, kind: output, shape index: {}, may-alias: {0,3}]
  %s4 = sld [smem:[#allocation0]]
  $region45: #{basic_conv2d.3} parent=0
    _
  %s6 = ssub.s32 1, %s4
  %s7 = scalar_select 0, %s6, %s4
  loop: start=0, step=1, limit=4
  $region2: #{basic_conv2d.3} parent=0 // loop_pre_header
    _
  $region3: #{basic_conv2d.3} parent=0 // loop_header
    %s9 = sphi 0, %s13
    %p10 = scmp.ge.s32.totalorder %s9, 4
    %s19 = sphi 0, %s21
    %s22 = sphi 0, %s19
    %s23 = sphi 0, %s22
    %s39 = sphi 0, %s23
    %s43 = sphi 0, %s43
    %s45 = sphi 0, %s43
    %s46 = sphi 0, %s45
    %s60 = sphi 0, %s46
    %s64 = sphi 0, %s64
    %s66 = sphi 0, %s64
    %s67 = sphi 0, %s66
    %s81 = sphi 0, %s67
    %s87 = sphi 0, %s89
    %s90 = sphi 0, %s87
    %s91 = sphi 0, %s90
    %s107 = sphi 0, %s91
  $region4: #{basic_conv2d.3} parent=0 // loop_header_branch
    %12 = sbr.rel (%p10) target = $region8
  $region5: #{basic_conv2d.3} parent=0 // loop_body
    %s14 = ssub.s32 %s9, 1
    %s15 = ssub.s32 %s9, 2
    %s16 = sadd.s32 %s9, 1
    %s17 = ssub.s32 %s9, %s16
    %p18 = scmp.eq.s32.totalorder %s17, 0
    %s20 = sadd.s32 %s19, 1
    %s21 = scalar_select %p18, %s19, %s20
    %p24 = pneg %p18
    %p25 = scmp.eq.s32.totalorder %s9, 1
    %p26 = por %p24, %p25
    %p27 = scmp.ne.s32.totalorder %s19, %s22
    %p28 = scmp.eq.s32.totalorder %s9, 0
    %p29 = por %p27, %p28
    %p30 = scmp.ne.s32.totalorder %s19, %s22
    %p31 = scmp.eq.s32.totalorder %s14, 1
    %p32 = por %p30, %p31
    %p33 = scmp.ne.s32.totalorder %s22, %s23
    %p34 = scmp.eq.s32.totalorder %s14, 0
    %p35 = por %p33, %p34
    %p36 = scmp.ne.s32.totalorder %s22, %s23
    %p37 = scmp.eq.s32.totalorder %s15, 1
    %p38 = por %p36, %p37
    %p40 = scmp.ne.s32.totalorder %s23, %s39
    %p41 = scmp.eq.s32.totalorder %s15, 0
    %p42 = por %p40, %p41
    %s44 = sadd.s32 %s43, 1
    %p47 = scmp.eq.s32.totalorder %s9, 1
    %p48 = scmp.ne.s32.totalorder %s43, %s45
    %p49 = scmp.eq.s32.totalorder %s9, 0
    %p50 = por %p48, %p49
    %p51 = scmp.ne.s32.totalorder %s43, %s45
    %p52 = scmp.eq.s32.totalorder %s14, 1
    %p53 = por %p51, %p52
    %p54 = scmp.ne.s32.totalorder %s45, %s46
    %p55 = scmp.eq.s32.totalorder %s14, 0
    %p56 = por %p54, %p55
    %p57 = scmp.ne.s32.totalorder %s45, %s46
    %p58 = scmp.eq.s32.totalorder %s15, 1
    %p59 = por %p57, %p58
    %p61 = scmp.ne.s32.totalorder %s46, %s60
    %p62 = scmp.eq.s32.totalorder %s15, 0
    %p63 = por %p61, %p62
    %s65 = sadd.s32 %s64, 1
    %p68 = scmp.eq.s32.totalorder %s9, 1
    %p69 = scmp.ne.s32.totalorder %s64, %s66
    %p70 = scmp.eq.s32.totalorder %s9, 0
    %p71 = por %p69, %p70
    %p72 = scmp.ne.s32.totalorder %s64, %s66
    %p73 = scmp.eq.s32.totalorder %s14, 1
    %p74 = por %p72, %p73
    %p75 = scmp.ne.s32.totalorder %s66, %s67
    %p76 = scmp.eq.s32.totalorder %s14, 0
    %p77 = por %p75, %p76
    %p78 = scmp.ne.s32.totalorder %s66, %s67
    %p79 = scmp.eq.s32.totalorder %s15, 1
    %p80 = por %p78, %p79
    %p82 = scmp.ne.s32.totalorder %s67, %s81
    %p83 = scmp.eq.s32.totalorder %s15, 0
    %p84 = por %p82, %p83
    %s85 = ssub.s32 %s9, %s16
    %p86 = scmp.eq.s32.totalorder %s85, 0
    %s88 = sadd.s32 %s87, 1
    %s89 = scalar_select %p86, %s87, %s88
    %p92 = pneg %p86
    %p93 = scmp.eq.s32.totalorder %s9, 1
    %p94 = por %p92, %p93
    %p95 = scmp.ne.s32.totalorder %s87, %s90
    %p96 = scmp.eq.s32.totalorder %s9, 0
    %p97 = por %p95, %p96
    %p98 = scmp.ne.s32.totalorder %s87, %s90
    %p99 = scmp.eq.s32.totalorder %s14, 1
    %p100 = por %p98, %p99
    %p101 = scmp.ne.s32.totalorder %s90, %s91
    %p102 = scmp.eq.s32.totalorder %s14, 0
    %p103 = por %p101, %p102
    %p104 = scmp.ne.s32.totalorder %s90, %s91
    %p105 = scmp.eq.s32.totalorder %s15, 1
    %p106 = por %p104, %p105
    %p108 = scmp.ne.s32.totalorder %s91, %s107
    %p109 = scmp.eq.s32.totalorder %s15, 0
    %p110 = por %p108, %p109
    %p111 = scmp.le.s32.totalorder 1, %s9
    %p112 = scmp.lt.s32.totalorder %s9, 3
    %p113 = pnand %p111, %p112
    %p114 = pneg %p113
    // Predicated region
    $region9: #{basic_conv2d.3} parent=5 // pred_check
      _
    $region10: #{basic_conv2d.3} parent=5 // pred_check_branch
      %116 = sbr.rel (%p113) target = $region12
    $region11: #{basic_conv2d.3} parent=5 // pred_region
      %s117 = ssub.s32 %s9, 1
      // Predicated region
      $region13: #{basic_conv2d.3} parent=11 // pred_check
        %p118 = pneg %p56
      $region14: #{basic_conv2d.3} parent=11 // pred_check_branch
        %120 = sbr.rel (%p118) target = $region16
      $region15: #{basic_conv2d.3} parent=11 // pred_region
        _
      $region16: #{basic_conv2d.3} parent=11 // pred_fallthru
        _
      // Predicated region
      $region17: #{basic_conv2d.3} parent=11 // pred_check
        %p121 = pneg %p77
      $region18: #{basic_conv2d.3} parent=11 // pred_check_branch
        %123 = sbr.rel (%p121) target = $region20
      $region19: #{basic_conv2d.3} parent=11 // pred_region
        _
      $region20: #{basic_conv2d.3} parent=11 // pred_fallthru
        _
    $region12: #{basic_conv2d.3} parent=5 // pred_fallthru
      _
    %p124 = scmp.lt.s32.totalorder %s9, 2
    // Predicated region
    $region21: #{basic_conv2d.3} parent=5 // pred_check
      %p125 = pneg %p124
    $region22: #{basic_conv2d.3} parent=5 // pred_check_branch
      %127 = sbr.rel (%p125) target = $region24
    $region23: #{basic_conv2d.3} parent=5 // pred_region
      // Predicated region
      $region25: #{basic_conv2d.3} parent=23 // pred_check
        %p128 = pneg %p29
      $region26: #{basic_conv2d.3} parent=23 // pred_check_branch
        %130 = sbr.rel (%p128) target = $region28
      $region27: #{basic_conv2d.3} parent=23 // pred_region
        %s131 = smul.u32 32, %s9
        %p132 = scmp.lt.s32.totalorder %s131, 63
        %s133 = scalar_select %p132, %s131, 63
        %s134 = smul.addr %s133, 8
        %s135 = scalar_lea.vmem %s0, %s134
        %s136 = smul.u32 32, %s9
      $region28: #{basic_conv2d.3} parent=23 // pred_fallthru
        _
    $region24: #{basic_conv2d.3} parent=5 // pred_fallthru
      _
    %p137 = scmp.le.s32.totalorder 1, %s9
    %p138 = scmp.lt.s32.totalorder %s9, 3
    %p139 = pnand %p137, %p138
    %p140 = pneg %p139
    // Predicated region
    $region29: #{basic_conv2d.3} parent=5 // pred_check
      _
    $region30: #{basic_conv2d.3} parent=5 // pred_check_branch
      %142 = sbr.rel (%p139) target = $region32
    $region31: #{basic_conv2d.3} parent=5 // pred_region
      %s143 = ssub.s32 %s9, 1
      %s144 = smul.u32 32, %s14
      %p145 = scmp.lt.s32.totalorder %s144, 63
      %s146 = scalar_select %p145, %s144, 63
      %s147 = smul.addr %s146, 8
      %s148 = scalar_lea.vmem %s0, %s147
      %p149 = pneg %p35
      %p150 = pneg %p32
      %p151 = pneg %p56
      %p152 = pneg %p53
      %p153 = pneg %p77
      %p154 = pneg %p74
      %p155 = pneg %p103
      %p156 = pneg %p100
      %s157 = smul.u32 32, %s14
      %p158 = scmp.lt.s32.totalorder %s157, 63
      %s159 = scalar_select %p158, %s157, 63
      %s160 = smul.addr %s159, 8
      %s161 = scalar_lea.vmem %s3, %s160
      %s162 = smul.u32 32, %s14
      %p163 = scmp.lt.s32.totalorder %s162, 63
      %s164 = scalar_select %p163, %s162, 63
      %s165 = smul.addr %s164, 8
      %s166 = scalar_lea.vmem %s0, %s165
      %s167 = smul.u32 32, %s14
      %s168 = smul.u32 32, %s14
      %p169 = scmp.lt.s32.totalorder %s168, 63
      %s170 = scalar_select %p169, %s168, 63
      %s171 = smul.addr %s170, 8
      %s172 = scalar_lea.vmem %s3, %s171
      %s173 = smul.u32 32, %s14
      %v174 = vld [vmem:[%s166] sm:$0xff]
      %v175 = vld [vmem:[%s166 + $0x8] sm:$0xff]
      %v176 = vld [vmem:[%s166 + $0x10] sm:$0xff]
      %v177 = vld [vmem:[%s166 + $0x18] sm:$0xff]
      %v178 = vld [vmem:[%s166 + $0x20] sm:$0xff]
      %v179 = vld [vmem:[%s166 + $0x28] sm:$0xff]
      %v180 = vld [vmem:[%s166 + $0x30] sm:$0xff]
      %v181 = vld [vmem:[%s166 + $0x38] sm:$0xff]
      %v182 = vld [vmem:[%s166 + $0x40] sm:$0xff]
      %v183 = vld [vmem:[%s166 + $0x48] sm:$0xff]
      %v184 = vld [vmem:[%s166 + $0x50] sm:$0xff]
      %v185 = vld [vmem:[%s166 + $0x58] sm:$0xff]
      %v186 = vld [vmem:[%s166 + $0x60] sm:$0xff]
      %v187 = vld [vmem:[%s166 + $0x68] sm:$0xff]
      %v188 = vld [vmem:[%s166 + $0x70] sm:$0xff]
      %v189 = vld [vmem:[%s166 + $0x78] sm:$0xff]
      %v190 = vld [vmem:[%s166 + $0x80] sm:$0xff]
      %v191 = vld [vmem:[%s166 + $0x88] sm:$0xff]
      %v192 = vld [vmem:[%s166 + $0x90] sm:$0xff]
      %v193 = vld [vmem:[%s166 + $0x98] sm:$0xff]
      %v194 = vld [vmem:[%s166 + $0xa0] sm:$0xff]
      %v195 = vld [vmem:[%s166 + $0xa8] sm:$0xff]
      %v196 = vld [vmem:[%s166 + $0xb0] sm:$0xff]
      %v197 = vld [vmem:[%s166 + $0xb8] sm:$0xff]
      %v198 = vld [vmem:[%s166 + $0xc0] sm:$0xff]
      %v199 = vld [vmem:[%s166 + $0xc8] sm:$0xff]
      %v200 = vld [vmem:[%s166 + $0xd0] sm:$0xff]
      %v201 = vld [vmem:[%s166 + $0xd8] sm:$0xff]
      %v202 = vld [vmem:[%s166 + $0xe0] sm:$0xff]
      %v203 = vld [vmem:[%s166 + $0xe8] sm:$0xff]
      %v204 = vld [vmem:[%s166 + $0xf0] sm:$0xff]
      %v205 = vld [vmem:[%s166 + $0xf8] sm:$0xff]
      %v206 = vld [vmem:[%s1] sm:$0x1]
      %v208 = vlaneseq
      %v209 = vshrl.u32 %v208, 7
      %v210 = vsub.s32 0, %v209
      %v211 = vrot.slane %v206, %v210
      %v213 = vmul.f32 %v174, %v211
      %v214 = vmul.f32 %v175, %v211
      %v215 = vmul.f32 %v176, %v211
      %v216 = vmul.f32 %v177, %v211
      %v217 = vmul.f32 %v178, %v211
      %v218 = vmul.f32 %v179, %v211
      %v219 = vmul.f32 %v180, %v211
      %v220 = vmul.f32 %v181, %v211
      %v221 = vmul.f32 %v182, %v211
      %v222 = vmul.f32 %v183, %v211
      %v223 = vmul.f32 %v184, %v211
      %v224 = vmul.f32 %v185, %v211
      %v225 = vmul.f32 %v186, %v211
      %v226 = vmul.f32 %v187, %v211
      %v227 = vmul.f32 %v188, %v211
      %v228 = vmul.f32 %v189, %v211
      %v229 = vmul.f32 %v190, %v211
      %v230 = vmul.f32 %v191, %v211
      %v231 = vmul.f32 %v192, %v211
      %v232 = vmul.f32 %v193, %v211
      %v233 = vmul.f32 %v194, %v211
      %v234 = vmul.f32 %v195, %v211
      %v235 = vmul.f32 %v196, %v211
      %v236 = vmul.f32 %v197, %v211
      %v237 = vmul.f32 %v198, %v211
      %v238 = vmul.f32 %v199, %v211
      %v239 = vmul.f32 %v200, %v211
      %v240 = vmul.f32 %v201, %v211
      %v241 = vmul.f32 %v202, %v211
      %v242 = vmul.f32 %v203, %v211
      %v243 = vmul.f32 %v204, %v211
      %v244 = vmul.f32 %v205, %v211
      %v245 = vld [vmem:[%s2] sm:$0x1]
      %v247 = vlaneseq
      %v248 = vshrl.u32 %v247, 7
      %v249 = vsub.s32 0, %v248
      %v250 = vrot.slane %v245, %v249
      %v252 = vadd.f32 %v213, %v250
      %v253 = vadd.f32 %v214, %v250
      %v254 = vadd.f32 %v215, %v250
      %v255 = vadd.f32 %v216, %v250
      %v256 = vadd.f32 %v217, %v250
      %v257 = vadd.f32 %v218, %v250
      %v258 = vadd.f32 %v219, %v250
      %v259 = vadd.f32 %v220, %v250
      %v260 = vadd.f32 %v221, %v250
      %v261 = vadd.f32 %v222, %v250
      %v262 = vadd.f32 %v223, %v250
      %v263 = vadd.f32 %v224, %v250
      %v264 = vadd.f32 %v225, %v250
      %v265 = vadd.f32 %v226, %v250
      %v266 = vadd.f32 %v227, %v250
      %v267 = vadd.f32 %v228, %v250
      %v268 = vadd.f32 %v229, %v250
      %v269 = vadd.f32 %v230, %v250
      %v270 = vadd.f32 %v231, %v250
      %v271 = vadd.f32 %v232, %v250
      %v272 = vadd.f32 %v233, %v250
      %v273 = vadd.f32 %v234, %v250
      %v274 = vadd.f32 %v235, %v250
      %v275 = vadd.f32 %v236, %v250
      %v276 = vadd.f32 %v237, %v250
      %v277 = vadd.f32 %v238, %v250
      %v278 = vadd.f32 %v239, %v250
      %v279 = vadd.f32 %v240, %v250
      %v280 = vadd.f32 %v241, %v250
      %v281 = vadd.f32 %v242, %v250
      %v282 = vadd.f32 %v243, %v250
      %v283 = vadd.f32 %v244, %v250
      %v284 = vmax.f32 %v252, 0.0
      %v285 = vmax.f32 %v253, 0.0
      %v286 = vmax.f32 %v254, 0.0
      %v287 = vmax.f32 %v255, 0.0
      %v288 = vmax.f32 %v256, 0.0
      %v289 = vmax.f32 %v257, 0.0
      %v290 = vmax.f32 %v258, 0.0
      %v291 = vmax.f32 %v259, 0.0
      %v292 = vmax.f32 %v260, 0.0
      %v293 = vmax.f32 %v261, 0.0
      %v294 = vmax.f32 %v262, 0.0
      %v295 = vmax.f32 %v263, 0.0
      %v296 = vmax.f32 %v264, 0.0
      %v297 = vmax.f32 %v265, 0.0
      %v298 = vmax.f32 %v266, 0.0
      %v299 = vmax.f32 %v267, 0.0
      %v300 = vmax.f32 %v268, 0.0
      %v301 = vmax.f32 %v269, 0.0
      %v302 = vmax.f32 %v270, 0.0
      %v303 = vmax.f32 %v271, 0.0
      %v304 = vmax.f32 %v272, 0.0
      %v305 = vmax.f32 %v273, 0.0
      %v306 = vmax.f32 %v274, 0.0
      %v307 = vmax.f32 %v275, 0.0
      %v308 = vmax.f32 %v276, 0.0
      %v309 = vmax.f32 %v277, 0.0
      %v310 = vmax.f32 %v278, 0.0
      %v311 = vmax.f32 %v279, 0.0
      %v312 = vmax.f32 %v280, 0.0
      %v313 = vmax.f32 %v281, 0.0
      %v314 = vmax.f32 %v282, 0.0
      %v315 = vmax.f32 %v283, 0.0
      %316 = vst [vmem:[%s172] sm:$0xff] %v284
      %317 = vst [vmem:[%s172 + $0x8] sm:$0xff] %v285
      %318 = vst [vmem:[%s172 + $0x10] sm:$0xff] %v286
      %319 = vst [vmem:[%s172 + $0x18] sm:$0xff] %v287
      %320 = vst [vmem:[%s172 + $0x20] sm:$0xff] %v288
      %321 = vst [vmem:[%s172 + $0x28] sm:$0xff] %v289
      %322 = vst [vmem:[%s172 + $0x30] sm:$0xff] %v290
      %323 = vst [vmem:[%s172 + $0x38] sm:$0xff] %v291
      %324 = vst [vmem:[%s172 + $0x40] sm:$0xff] %v292
      %325 = vst [vmem:[%s172 + $0x48] sm:$0xff] %v293
      %326 = vst [vmem:[%s172 + $0x50] sm:$0xff] %v294
      %327 = vst [vmem:[%s172 + $0x58] sm:$0xff] %v295
      %328 = vst [vmem:[%s172 + $0x60] sm:$0xff] %v296
      %329 = vst [vmem:[%s172 + $0x68] sm:$0xff] %v297
      %330 = vst [vmem:[%s172 + $0x70] sm:$0xff] %v298
      %331 = vst [vmem:[%s172 + $0x78] sm:$0xff] %v299
      %332 = vst [vmem:[%s172 + $0x80] sm:$0xff] %v300
      %333 = vst [vmem:[%s172 + $0x88] sm:$0xff] %v301
      %334 = vst [vmem:[%s172 + $0x90] sm:$0xff] %v302
      %335 = vst [vmem:[%s172 + $0x98] sm:$0xff] %v303
      %336 = vst [vmem:[%s172 + $0xa0] sm:$0xff] %v304
      %337 = vst [vmem:[%s172 + $0xa8] sm:$0xff] %v305
      %338 = vst [vmem:[%s172 + $0xb0] sm:$0xff] %v306
      %339 = vst [vmem:[%s172 + $0xb8] sm:$0xff] %v307
      %340 = vst [vmem:[%s172 + $0xc0] sm:$0xff] %v308
      %341 = vst [vmem:[%s172 + $0xc8] sm:$0xff] %v309
      %342 = vst [vmem:[%s172 + $0xd0] sm:$0xff] %v310
      %343 = vst [vmem:[%s172 + $0xd8] sm:$0xff] %v311
      %344 = vst [vmem:[%s172 + $0xe0] sm:$0xff] %v312
      %345 = vst [vmem:[%s172 + $0xe8] sm:$0xff] %v313
      %346 = vst [vmem:[%s172 + $0xf0] sm:$0xff] %v314
      %347 = vst [vmem:[%s172 + $0xf8] sm:$0xff] %v315
      %s348 = smul.u32 32, %s14
      %p349 = scmp.lt.s32.totalorder %s348, 63
      %s350 = scalar_select %p349, %s348, 63
      %s351 = smul.addr %s350, 8
      %s352 = scalar_lea.vmem %s3, %s351
      // Predicated region
      $region33: #{basic_conv2d.3} parent=31 // pred_check
        %p353 = pneg %p100
      $region34: #{basic_conv2d.3} parent=31 // pred_check_branch
        %355 = sbr.rel (%p353) target = $region36
      $region35: #{basic_conv2d.3} parent=31 // pred_region
        %s356 = smul.u32 32, %s14
      $region36: #{basic_conv2d.3} parent=31 // pred_fallthru
        _
    $region32: #{basic_conv2d.3} parent=5 // pred_fallthru
      _
    %p357 = scmp.le.s32.totalorder 2, %s9
    // Predicated region
    $region37: #{basic_conv2d.3} parent=5 // pred_check
      %p358 = pneg %p357
    $region38: #{basic_conv2d.3} parent=5 // pred_check_branch
      %360 = sbr.rel (%p358) target = $region40
    $region39: #{basic_conv2d.3} parent=5 // pred_region
      %s361 = ssub.s32 %s9, 2
      // Predicated region
      $region41: #{basic_conv2d.3} parent=39 // pred_check
        %p362 = pneg %p106
      $region42: #{basic_conv2d.3} parent=39 // pred_check_branch
        %364 = sbr.rel (%p362) target = $region44
      $region43: #{basic_conv2d.3} parent=39 // pred_region
        %s365 = smul.u32 32, %s15
        %p366 = scmp.lt.s32.totalorder %s365, 63
        %s367 = scalar_select %p366, %s365, 63
        %s368 = smul.addr %s367, 8
        %s369 = scalar_lea.vmem %s3, %s368
      $region44: #{basic_conv2d.3} parent=39 // pred_fallthru
        _
    $region40: #{basic_conv2d.3} parent=5 // pred_fallthru
      _
  $region6: #{basic_conv2d.3} parent=0 // loop_footer
    %s13 = sadd.s32 1, %s9
  $region7: #{basic_conv2d.3} parent=0 // loop_footer_branch
    %8 = sbr.rel target = $region3
  $region8: #{basic_conv2d.3} parent=0 // loop_exit
    _

// kernel: basic_conv2d.2
$region0: #{basic_conv2d.2}
  #allocation0 [shape = 'u32[]', space=smem, size = 0x4, offset = 0x4, fixed_abs, tag = 'smem constant byte address 0x4 - core index']
  #allocation1 [shape = 'u32[144,128]{1,0:T(1,128)}', space=vmem, size = 0x12000, scoped, tag = 'internal scratch']
  %s0 = inlined_call_operand.vmem [shape: bf16[512,128], index: 0, kind: input, shape index: {}]
  %s1 = inlined_call_operand.vmem [shape: bf16[128,128], index: 1, kind: input, shape index: {}]
  %s2 = inlined_call_operand.vmem [shape: f32[512,128], index: 2, kind: output, shape index: {0}]
  %s3 = inlined_call_operand.vmem [shape: f32[16,128], index: 3, kind: output, shape index: {1}]
  %s4 = inlined_call_operand.vmem [shape: f32[16,128], index: 4, kind: output, shape index: {2}]
  %5 = xla_tuple %s2, %s3, %s4
  %s6 = sld [smem:[#allocation0]]
  $region61: #{basic_conv2d.2} parent=0
    _
  %s8 = ssub.s32 1, %s6
  %s9 = scalar_select 0, %s8, %s6
  loop: start=0, step=1, limit=4
  $region2: #{basic_conv2d.2} parent=0 // loop_pre_header
    _
  $region3: #{basic_conv2d.2} parent=0 // loop_header
    %s11 = sphi 0, %s15
    %p12 = scmp.ge.s32.totalorder %s11, 4
    %s18 = sphi 0, %s30
    %s19 = sphi 0, %s26
    %s20 = sphi 0, %s18
    %s21 = sphi 0, %s19
    %s22 = sphi 0, %s20
    %s23 = sphi 0, %s21
    %s35 = sphi 0, %s37
    %s38 = sphi 0, %s35
    %s39 = sphi 0, %s38
    %s55 = sphi 0, %s39
    %s59 = sphi 0, %s59
    %s61 = sphi 0, %s59
    %s62 = sphi 0, %s61
    %s76 = sphi 0, %s62
    %s84 = sphi 0, %s86
    %s87 = sphi 0, %s84
    %s88 = sphi 0, %s87
    %s104 = sphi 0, %s88
    %s110 = sphi 0, %s112
    %s113 = sphi 0, %s110
    %s114 = sphi 0, %s113
    %s130 = sphi 0, %s114
    %s136 = sphi 0, %s138
    %s139 = sphi 0, %s136
    %s140 = sphi 0, %s139
    %s156 = sphi 0, %s140
  $region4: #{basic_conv2d.2} parent=0 // loop_header_branch
    %14 = sbr.rel (%p12) target = $region8
  $region5: #{basic_conv2d.2} parent=0 // loop_body
    %s16 = ssub.s32 %s11, 1
    %s17 = ssub.s32 %s11, 2
    %s24 = sadd.s32 1, %s19
    %p25 = scmp.ge.s32.totalorder %s24, 1
    %s26 = scalar_select %p25, 0, %s24
    %s27 = sadd.s32 1, %s18
    %s28 = scalar_select %p25, %s27, %s18
    %p29 = scmp.ge.s32.totalorder %s28, 2
    %s30 = scalar_select %p29, 0, %s28
    %s31 = sadd.s32 %s18, %s19
    %s32 = sadd.s32 %s30, %s26
    %s33 = ssub.s32 %s31, %s32
    %p34 = scmp.eq.s32.totalorder %s33, 0
    %s36 = sadd.s32 %s35, 1
    %s37 = scalar_select %p34, %s35, %s36
    %p40 = pneg %p34
    %p41 = scmp.eq.s32.totalorder %s11, 1
    %p42 = por %p40, %p41
    %p43 = scmp.ne.s32.totalorder %s35, %s38
    %p44 = scmp.eq.s32.totalorder %s11, 0
    %p45 = por %p43, %p44
    %p46 = scmp.ne.s32.totalorder %s35, %s38
    %p47 = scmp.eq.s32.totalorder %s16, 1
    %p48 = por %p46, %p47
    %p49 = scmp.ne.s32.totalorder %s38, %s39
    %p50 = scmp.eq.s32.totalorder %s16, 0
    %p51 = por %p49, %p50
    %p52 = scmp.ne.s32.totalorder %s38, %s39
    %p53 = scmp.eq.s32.totalorder %s17, 1
    %p54 = por %p52, %p53
    %p56 = scmp.ne.s32.totalorder %s39, %s55
    %p57 = scmp.eq.s32.totalorder %s17, 0
    %p58 = por %p56, %p57
    %s60 = sadd.s32 %s59, 1
    %p63 = scmp.eq.s32.totalorder %s11, 1
    %p64 = scmp.ne.s32.totalorder %s59, %s61
    %p65 = scmp.eq.s32.totalorder %s11, 0
    %p66 = por %p64, %p65
    %p67 = scmp.ne.s32.totalorder %s59, %s61
    %p68 = scmp.eq.s32.totalorder %s16, 1
    %p69 = por %p67, %p68
    %p70 = scmp.ne.s32.totalorder %s61, %s62
    %p71 = scmp.eq.s32.totalorder %s16, 0
    %p72 = por %p70, %p71
    %p73 = scmp.ne.s32.totalorder %s61, %s62
    %p74 = scmp.eq.s32.totalorder %s17, 1
    %p75 = por %p73, %p74
    %p77 = scmp.ne.s32.totalorder %s62, %s76
    %p78 = scmp.eq.s32.totalorder %s17, 0
    %p79 = por %p77, %p78
    %s80 = sadd.s32 %s18, %s19
    %s81 = sadd.s32 %s30, %s26
    %s82 = ssub.s32 %s80, %s81
    %p83 = scmp.eq.s32.totalorder %s82, 0
    %s85 = sadd.s32 %s84, 1
    %s86 = scalar_select %p83, %s84, %s85
    %p89 = pneg %p83
    %p90 = scmp.eq.s32.totalorder %s11, 1
    %p91 = por %p89, %p90
    %p92 = scmp.ne.s32.totalorder %s84, %s87
    %p93 = scmp.eq.s32.totalorder %s11, 0
    %p94 = por %p92, %p93
    %p95 = scmp.ne.s32.totalorder %s84, %s87
    %p96 = scmp.eq.s32.totalorder %s16, 1
    %p97 = por %p95, %p96
    %p98 = scmp.ne.s32.totalorder %s87, %s88
    %p99 = scmp.eq.s32.totalorder %s16, 0
    %p100 = por %p98, %p99
    %p101 = scmp.ne.s32.totalorder %s87, %s88
    %p102 = scmp.eq.s32.totalorder %s17, 1
    %p103 = por %p101, %p102
    %p105 = scmp.ne.s32.totalorder %s88, %s104
    %p106 = scmp.eq.s32.totalorder %s17, 0
    %p107 = por %p105, %p106
    %s108 = ssub.s32 %s18, %s30
    %p109 = scmp.eq.s32.totalorder %s108, 0
    %s111 = sadd.s32 %s110, 1
    %s112 = scalar_select %p109, %s110, %s111
    %p115 = pneg %p109
    %p116 = scmp.eq.s32.totalorder %s11, 1
    %p117 = por %p115, %p116
    %p118 = scmp.ne.s32.totalorder %s110, %s113
    %p119 = scmp.eq.s32.totalorder %s11, 0
    %p120 = por %p118, %p119
    %p121 = scmp.ne.s32.totalorder %s110, %s113
    %p122 = scmp.eq.s32.totalorder %s16, 1
    %p123 = por %p121, %p122
    %p124 = scmp.ne.s32.totalorder %s113, %s114
    %p125 = scmp.eq.s32.totalorder %s16, 0
    %p126 = por %p124, %p125
    %p127 = scmp.ne.s32.totalorder %s113, %s114
    %p128 = scmp.eq.s32.totalorder %s17, 1
    %p129 = por %p127, %p128
    %p131 = scmp.ne.s32.totalorder %s114, %s130
    %p132 = scmp.eq.s32.totalorder %s17, 0
    %p133 = por %p131, %p132
    %s134 = ssub.s32 %s18, %s30
    %p135 = scmp.eq.s32.totalorder %s134, 0
    %s137 = sadd.s32 %s136, 1
    %s138 = scalar_select %p135, %s136, %s137
    %p141 = pneg %p135
    %p142 = scmp.eq.s32.totalorder %s11, 1
    %p143 = por %p141, %p142
    %p144 = scmp.ne.s32.totalorder %s136, %s139
    %p145 = scmp.eq.s32.totalorder %s11, 0
    %p146 = por %p144, %p145
    %p147 = scmp.ne.s32.totalorder %s136, %s139
    %p148 = scmp.eq.s32.totalorder %s16, 1
    %p149 = por %p147, %p148
    %p150 = scmp.ne.s32.totalorder %s139, %s140
    %p151 = scmp.eq.s32.totalorder %s16, 0
    %p152 = por %p150, %p151
    %p153 = scmp.ne.s32.totalorder %s139, %s140
    %p154 = scmp.eq.s32.totalorder %s17, 1
    %p155 = por %p153, %p154
    %p157 = scmp.ne.s32.totalorder %s140, %s156
    %p158 = scmp.eq.s32.totalorder %s17, 0
    %p159 = por %p157, %p158
    %p160 = scmp.le.s32.totalorder 1, %s11
    %p161 = scmp.lt.s32.totalorder %s11, 3
    %p162 = pnand %p160, %p161
    %p163 = pneg %p162
    // Predicated region
    $region9: #{basic_conv2d.2} parent=5 // pred_check
      _
    $region10: #{basic_conv2d.2} parent=5 // pred_check_branch
      %165 = sbr.rel (%p162) target = $region12
    $region11: #{basic_conv2d.2} parent=5 // pred_region
      %s166 = ssub.s32 %s11, 1
      // Predicated region
      $region13: #{basic_conv2d.2} parent=11 // pred_check
        %p167 = pneg %p72
      $region14: #{basic_conv2d.2} parent=11 // pred_check_branch
        %169 = sbr.rel (%p167) target = $region16
      $region15: #{basic_conv2d.2} parent=11 // pred_region
        _
      $region16: #{basic_conv2d.2} parent=11 // pred_fallthru
        _
    $region12: #{basic_conv2d.2} parent=5 // pred_fallthru
      _
    %p170 = scmp.lt.s32.totalorder %s11, 2
    // Predicated region
    $region17: #{basic_conv2d.2} parent=5 // pred_check
      %p171 = pneg %p170
    $region18: #{basic_conv2d.2} parent=5 // pred_check_branch
      %173 = sbr.rel (%p171) target = $region20
    $region19: #{basic_conv2d.2} parent=5 // pred_region
      // Predicated region
      $region21: #{basic_conv2d.2} parent=19 // pred_check
        %p174 = pneg %p45
      $region22: #{basic_conv2d.2} parent=19 // pred_check_branch
        %176 = sbr.rel (%p174) target = $region24
      $region23: #{basic_conv2d.2} parent=19 // pred_region
        %s177 = sadd.s32 %s18, %s19
        %s178 = smul.u32 32, %s177
        %p179 = scmp.lt.s32.totalorder %s178, 63
        %s180 = scalar_select %p179, %s178, 63
        %s181 = smul.addr %s180, 4
        %s182 = scalar_lea.vmem %s0, %s181
        %s183 = sadd.s32 %s18, %s19
        %s184 = smul.u32 32, %s183
      $region24: #{basic_conv2d.2} parent=19 // pred_fallthru
        _
    $region20: #{basic_conv2d.2} parent=5 // pred_fallthru
      _
    %p185 = scmp.le.s32.totalorder 1, %s11
    %p186 = scmp.lt.s32.totalorder %s11, 3
    %p187 = pnand %p185, %p186
    %p188 = pneg %p187
    // Predicated region
    $region25: #{basic_conv2d.2} parent=5 // pred_check
      _
    $region26: #{basic_conv2d.2} parent=5 // pred_check_branch
      %190 = sbr.rel (%p187) target = $region28
    $region27: #{basic_conv2d.2} parent=5 // pred_region
      %s191 = ssub.s32 %s11, 1
      %s192 = sadd.s32 %s20, %s21
      %s193 = smul.u32 32, %s192
      %p194 = scmp.lt.s32.totalorder %s193, 63
      %s195 = scalar_select %p194, %s193, 63
      %s196 = smul.addr %s195, 4
      %s197 = scalar_lea.vmem %s0, %s196
      %p198 = pneg %p51
      %p199 = pneg %p48
      %p200 = pneg %p72
      %p201 = pneg %p69
      %p202 = pneg %p100
      %p203 = pneg %p97
      %s204 = sadd.s32 %s20, %s21
      %s205 = smul.u32 32, %s204
      %p206 = scmp.lt.s32.totalorder %s205, 63
      %s207 = scalar_select %p206, %s205, 63
      %s208 = smul.addr %s207, 8
      %s209 = scalar_lea.vmem %s2, %s208
      %p210 = pneg %p126
      %p211 = pneg %p123
      %p212 = scmp.lt.s32.totalorder %s20, 1
      %s213 = scalar_select %p212, %s20, 1
      %s214 = smul.addr %s213, 8
      %s215 = scalar_lea.vmem %s3, %s214
      %p216 = pneg %p152
      %p217 = pneg %p149
      %p218 = scmp.lt.s32.totalorder %s20, 1
      %s219 = scalar_select %p218, %s20, 1
      %s220 = smul.addr %s219, 8
      %s221 = scalar_lea.vmem %s4, %s220
      %s222 = sadd.s32 %s20, %s21
      %s223 = smul.u32 32, %s222
      %p224 = scmp.lt.s32.totalorder %s223, 63
      %s225 = scalar_select %p224, %s223, 63
      %s226 = smul.addr %s225, 4
      %s227 = scalar_lea.vmem %s0, %s226
      %s228 = sadd.s32 %s20, %s21
      %s229 = smul.u32 32, %s228
      %s230 = sadd.s32 %s20, %s21
      %s231 = smul.u32 32, %s230
      %p232 = scmp.lt.s32.totalorder %s231, 63
      %s233 = scalar_select %p232, %s231, 63
      %s234 = smul.addr %s233, 8
      %s235 = scalar_lea.vmem %s2, %s234
      %s236 = sadd.s32 %s20, %s21
      %s237 = smul.u32 32, %s236
      %p238 = scmp.lt.s32.totalorder %s20, 1
      %s239 = scalar_select %p238, %s20, 1
      %s240 = smul.addr %s239, 8
      %s241 = scalar_lea.vmem %s3, %s240
      %p242 = scmp.lt.s32.totalorder %s20, 1
      %s243 = scalar_select %p242, %s20, 1
      %s244 = smul.addr %s243, 8
      %s245 = scalar_lea.vmem %s4, %s244
      %p247 = scmp.eq.s32.totalorder %s21, 0
      // Predicated region
      $region29: #{basic_conv2d.2} parent=27 // pred_check
        %p248 = pneg %p247
      $region30: #{basic_conv2d.2} parent=27 // pred_check_branch
        %250 = sbr.rel (%p248) target = $region32
      $region31: #{basic_conv2d.2} parent=27 // pred_region
        %251 = vst [vmem:[%s241] sm:$0xff] 0.0
        %252 = vst [vmem:[%s245] sm:$0xff] 0.0
      $region32: #{basic_conv2d.2} parent=27 // pred_fallthru
        _
      %v253 = vld [vmem:[%s227] sm:$0xf]
      %v254 = vld [vmem:[%s227 + $0x4] sm:$0xf]
      %v255 = vld [vmem:[%s227 + $0x8] sm:$0xf]
      %v256 = vld [vmem:[%s227 + $0xc] sm:$0xf]
      %v257 = vld [vmem:[%s227 + $0x10] sm:$0xf]
      %v258 = vld [vmem:[%s227 + $0x14] sm:$0xf]
      %v259 = vld [vmem:[%s227 + $0x18] sm:$0xf]
      %v260 = vld [vmem:[%s227 + $0x1c] sm:$0xf]
      %v261 = vld [vmem:[%s227 + $0x20] sm:$0xf]
      %v262 = vld [vmem:[%s227 + $0x24] sm:$0xf]
      %v263 = vld [vmem:[%s227 + $0x28] sm:$0xf]
      %v264 = vld [vmem:[%s227 + $0x2c] sm:$0xf]
      %v265 = vld [vmem:[%s227 + $0x30] sm:$0xf]
      %v266 = vld [vmem:[%s227 + $0x34] sm:$0xf]
      %v267 = vld [vmem:[%s227 + $0x38] sm:$0xf]
      %v268 = vld [vmem:[%s227 + $0x3c] sm:$0xf]
      %v269 = vld [vmem:[%s227 + $0x40] sm:$0xf]
      %v270 = vld [vmem:[%s227 + $0x44] sm:$0xf]
      %v271 = vld [vmem:[%s227 + $0x48] sm:$0xf]
      %v272 = vld [vmem:[%s227 + $0x4c] sm:$0xf]
      %v273 = vld [vmem:[%s227 + $0x50] sm:$0xf]
      %v274 = vld [vmem:[%s227 + $0x54] sm:$0xf]
      %v275 = vld [vmem:[%s227 + $0x58] sm:$0xf]
      %v276 = vld [vmem:[%s227 + $0x5c] sm:$0xf]
      %v277 = vld [vmem:[%s227 + $0x60] sm:$0xf]
      %v278 = vld [vmem:[%s227 + $0x64] sm:$0xf]
      %v279 = vld [vmem:[%s227 + $0x68] sm:$0xf]
      %v280 = vld [vmem:[%s227 + $0x6c] sm:$0xf]
      %v281 = vld [vmem:[%s227 + $0x70] sm:$0xf]
      %v282 = vld [vmem:[%s227 + $0x74] sm:$0xf]
      %v283 = vld [vmem:[%s227 + $0x78] sm:$0xf]
      %v284 = vld [vmem:[%s227 + $0x7c] sm:$0xf]
      %v285 = vld [vmem:[%s1] sm:$0xf]
      %v286 = vld [vmem:[%s1 + $0x4] sm:$0xf]
      %v287 = vld [vmem:[%s1 + $0x8] sm:$0xf]
      %v288 = vld [vmem:[%s1 + $0xc] sm:$0xf]
      %v289 = vld [vmem:[%s1 + $0x10] sm:$0xf]
      %v290 = vld [vmem:[%s1 + $0x14] sm:$0xf]
      %v291 = vld [vmem:[%s1 + $0x18] sm:$0xf]
      %v292 = vld [vmem:[%s1 + $0x1c] sm:$0xf]
      %v293 = vld [vmem:[%s1 + $0x20] sm:$0xf]
      %v294 = vld [vmem:[%s1 + $0x24] sm:$0xf]
      %v295 = vld [vmem:[%s1 + $0x28] sm:$0xf]
      %v296 = vld [vmem:[%s1 + $0x2c] sm:$0xf]
      %v297 = vld [vmem:[%s1 + $0x30] sm:$0xf]
      %v298 = vld [vmem:[%s1 + $0x34] sm:$0xf]
      %v299 = vld [vmem:[%s1 + $0x38] sm:$0xf]
      %v300 = vld [vmem:[%s1 + $0x3c] sm:$0xf]
      %v333 = vunpack.c.l.b16 %v253
      %v334 = vunpack.c.l.b16 %v254
      %v335 = vunpack.c.l.b16 %v255
      %v336 = vunpack.c.l.b16 %v256
      %v337 = vunpack.c.l.b16 %v257
      %v338 = vunpack.c.l.b16 %v258
      %v339 = vunpack.c.l.b16 %v259
      %v340 = vunpack.c.l.b16 %v260
      %v341 = vunpack.c.l.b16 %v261
      %v342 = vunpack.c.l.b16 %v262
      %v343 = vunpack.c.l.b16 %v263
      %v344 = vunpack.c.l.b16 %v264
      %v345 = vunpack.c.l.b16 %v265
      %v346 = vunpack.c.l.b16 %v266
      %v347 = vunpack.c.l.b16 %v267
      %v348 = vunpack.c.l.b16 %v268
      %v349 = vunpack.c.l.b16 %v269
      %v350 = vunpack.c.l.b16 %v270
      %v351 = vunpack.c.l.b16 %v271
      %v352 = vunpack.c.l.b16 %v272
      %v353 = vunpack.c.l.b16 %v273
      %v354 = vunpack.c.l.b16 %v274
      %v355 = vunpack.c.l.b16 %v275
      %v356 = vunpack.c.l.b16 %v276
      %v357 = vunpack.c.l.b16 %v277
      %v358 = vunpack.c.l.b16 %v278
      %v359 = vunpack.c.l.b16 %v279
      %v360 = vunpack.c.l.b16 %v280
      %v361 = vunpack.c.l.b16 %v281
      %v362 = vunpack.c.l.b16 %v282
      %v363 = vunpack.c.l.b16 %v283
      %v364 = vunpack.c.l.b16 %v284
      %v365 = vpack.c.b16 %v334, %v333
      %v366 = vpack.c.b16 %v336, %v335
      %v367 = vpack.c.b16 %v338, %v337
      %v368 = vpack.c.b16 %v340, %v339
      %v369 = vpack.c.b16 %v342, %v341
      %v370 = vpack.c.b16 %v344, %v343
      %v371 = vpack.c.b16 %v346, %v345
      %v372 = vpack.c.b16 %v348, %v347
      %v373 = vpack.c.b16 %v350, %v349
      %v374 = vpack.c.b16 %v352, %v351
      %v375 = vpack.c.b16 %v354, %v353
      %v376 = vpack.c.b16 %v356, %v355
      %v377 = vpack.c.b16 %v358, %v357
      %v378 = vpack.c.b16 %v360, %v359
      %v379 = vpack.c.b16 %v362, %v361
      %v380 = vpack.c.b16 %v364, %v363
      %v413 = vunpack.c.l.b16 %v285
      %v414 = vunpack.c.l.b16 %v286
      %v415 = vunpack.c.l.b16 %v287
      %v416 = vunpack.c.l.b16 %v288
      %v417 = vunpack.c.l.b16 %v289
      %v418 = vunpack.c.l.b16 %v290
      %v419 = vunpack.c.l.b16 %v291
      %v420 = vunpack.c.l.b16 %v292
      %v421 = vunpack.c.l.b16 %v293
      %v422 = vunpack.c.l.b16 %v294
      %v423 = vunpack.c.l.b16 %v295
      %v424 = vunpack.c.l.b16 %v296
      %v425 = vunpack.c.l.b16 %v297
      %v426 = vunpack.c.l.b16 %v298
      %v427 = vunpack.c.l.b16 %v299
      %v428 = vunpack.c.l.b16 %v300
      %v429 = vpack.c.b16 %v414, %v413
      %v430 = vpack.c.b16 %v416, %v415
      %v431 = vpack.c.b16 %v418, %v417
      %v432 = vpack.c.b16 %v420, %v419
      %v433 = vpack.c.b16 %v422, %v421
      %v434 = vpack.c.b16 %v424, %v423
      %v435 = vpack.c.b16 %v426, %v425
      %v436 = vpack.c.b16 %v428, %v427
      %445 = vmatprep.subr.bf16.mxu0 0
      %446 = vmatpush1.bf16.msra.mxu0 %v429
      %447 = vmatprep.subr.bf16.mxu0 0
      %448 = vmatpush1.bf16.msra.mxu0 %v430
      %449 = vmatprep.subr.bf16.mxu0 0
      %450 = vmatpush1.bf16.msra.mxu0 %v431
      %451 = vmatprep.subr.bf16.mxu0 0
      %452 = vmatpush1.bf16.msra.mxu0 %v432
      %453 = vmatprep.subr.bf16.mxu0 0
      %454 = vmatpush1.bf16.msra.mxu0 %v433
      %455 = vmatprep.subr.bf16.mxu0 0
      %456 = vmatpush1.bf16.msra.mxu0 %v434
      %457 = vmatprep.subr.bf16.mxu0 0
      %458 = vmatpush1.bf16.msra.mxu0 %v435
      %459 = vmatprep.subr.bf16.mxu0 0
      %460 = vmatpush1.bf16.msra.mxu0 %v436
      %461 = vmatprep.subr.bf16.mxu0 0
      %462 = vmatpush1.bf16.msra.mxu0 0
      %463 = vmatprep.subr.bf16.mxu0 0
      %464 = vmatpush1.bf16.msra.mxu0 0
      %465 = vmatprep.subr.bf16.mxu0 0
      %466 = vmatpush1.bf16.msra.mxu0 0
      %467 = vmatprep.subr.bf16.mxu0 0
      %468 = vmatpush1.bf16.msra.mxu0 0
      %469 = vmatprep.subr.bf16.mxu0 0
      %470 = vmatpush1.bf16.msra.mxu0 0
      %471 = vmatprep.subr.bf16.mxu0 0
      %472 = vmatpush1.bf16.msra.mxu0 0
      %473 = vmatprep.subr.bf16.mxu0 0
      %474 = vmatpush1.bf16.msra.mxu0 0
      %475 = vmatprep.subr.bf16.mxu0 0
      %476 = vmatpush1.bf16.msra.mxu0 0
      %477 = vmatprep.mubr.bf16.mxu0 0
      %478 = vmatmul.mubr.bf16.gmra.mrb[0].mxu0 %v365
      %v479 = vpop.f32.mrb[0].mxu0
      %v480 = vadd.f32 0.0, %v479
      %v481 = vpop.f32.mrb[0].mxu0
      %v482 = vpop.f32.mrb[0].mxu0
      %v483 = vadd.f32 0.0, %v482
      %v484 = vpop.f32.mrb[0].mxu0
      %485 = vmatprep.mubr.bf16.mxu0 0
      %486 = vmatmul.mubr.bf16.gmra.mrb[0].mxu0 %v366
      %v487 = vpop.f32.mrb[0].mxu0
      %v488 = vadd.f32 0.0, %v487
      %v489 = vpop.f32.mrb[0].mxu0
      %v490 = vpop.f32.mrb[0].mxu0
      %v491 = vadd.f32 0.0, %v490
      %v492 = vpop.f32.mrb[0].mxu0
      %493 = vmatprep.mubr.bf16.mxu0 0
      %494 = vmatmul.mubr.bf16.gmra.mrb[0].mxu0 %v367
      %v495 = vpop.f32.mrb[0].mxu0
      %v496 = vadd.f32 0.0, %v495
      %v497 = vpop.f32.mrb[0].mxu0
      %v498 = vpop.f32.mrb[0].mxu0
      %v499 = vadd.f32 0.0, %v498
      %v500 = vpop.f32.mrb[0].mxu0
      %501 = vmatprep.mubr.bf16.mxu0 0
      %502 = vmatmul.mubr.bf16.gmra.mrb[0].mxu0 %v368
      %v503 = vpop.f32.mrb[0].mxu0
      %v504 = vadd.f32 0.0, %v503
      %v505 = vpop.f32.mrb[0].mxu0
      %v506 = vpop.f32.mrb[0].mxu0
      %v507 = vadd.f32 0.0, %v506
      %v508 = vpop.f32.mrb[0].mxu0
      %509 = vmatprep.mubr.bf16.mxu0 0
      %510 = vmatmul.mubr.bf16.gmra.mrb[0].mxu0 %v369
      %v511 = vpop.f32.mrb[0].mxu0
      %v512 = vadd.f32 0.0, %v511
      %v513 = vpop.f32.mrb[0].mxu0
      %v514 = vpop.f32.mrb[0].mxu0
      %v515 = vadd.f32 0.0, %v514
      %v516 = vpop.f32.mrb[0].mxu0
      %517 = vmatprep.mubr.bf16.mxu0 0
      %518 = vmatmul.mubr.bf16.gmra.mrb[0].mxu0 %v370
      %v519 = vpop.f32.mrb[0].mxu0
      %v520 = vadd.f32 0.0, %v519
      %v521 = vpop.f32.mrb[0].mxu0
      %v522 = vpop.f32.mrb[0].mxu0
      %v523 = vadd.f32 0.0, %v522
      %v524 = vpop.f32.mrb[0].mxu0
      %525 = vmatprep.mubr.bf16.mxu0 0
      %526 = vmatmul.mubr.bf16.gmra.mrb[0].mxu0 %v371
      %v527 = vpop.f32.mrb[0].mxu0
      %v528 = vadd.f32 0.0, %v527
      %v529 = vpop.f32.mrb[0].mxu0
      %v530 = vpop.f32.mrb[0].mxu0
      %v531 = vadd.f32 0.0, %v530
      %v532 = vpop.f32.mrb[0].mxu0
      %533 = vmatprep.mubr.bf16.mxu0 0
      %534 = vmatmul.mubr.bf16.gmra.mrb[0].mxu0 %v372
      %v535 = vpop.f32.mrb[0].mxu0
      %v536 = vadd.f32 0.0, %v535
      %v537 = vpop.f32.mrb[0].mxu0
      %v538 = vpop.f32.mrb[0].mxu0
      %v539 = vadd.f32 0.0, %v538
      %v540 = vpop.f32.mrb[0].mxu0
      %541 = vmatprep.mubr.bf16.mxu0 0
      %542 = vmatmul.mubr.bf16.gmra.mrb[0].mxu0 %v373
      %v543 = vpop.f32.mrb[0].mxu0
      %v544 = vadd.f32 0.0, %v543
      %v545 = vpop.f32.mrb[0].mxu0
      %v546 = vpop.f32.mrb[0].mxu0
      %v547 = vadd.f32 0.0, %v546
      %v548 = vpop.f32.mrb[0].mxu0
      %549 = vmatprep.mubr.bf16.mxu0 0
      %550 = vmatmul.mubr.bf16.gmra.mrb[0].mxu0 %v374
      %v551 = vpop.f32.mrb[0].mxu0
      %v552 = vadd.f32 0.0, %v551
      %v553 = vpop.f32.mrb[0].mxu0
      %v554 = vpop.f32.mrb[0].mxu0
      %v555 = vadd.f32 0.0, %v554
      %v556 = vpop.f32.mrb[0].mxu0
      %557 = vmatprep.mubr.bf16.mxu0 0
      %558 = vmatmul.mubr.bf16.gmra.mrb[0].mxu0 %v375
      %v559 = vpop.f32.mrb[0].mxu0
      %v560 = vadd.f32 0.0, %v559
      %v561 = vpop.f32.mrb[0].mxu0
      %v562 = vpop.f32.mrb[0].mxu0
      %v563 = vadd.f32 0.0, %v562
      %v564 = vpop.f32.mrb[0].mxu0
      %565 = vmatprep.mubr.bf16.mxu0 0
      %566 = vmatmul.mubr.bf16.gmra.mrb[0].mxu0 %v376
      %v567 = vpop.f32.mrb[0].mxu0
      %v568 = vadd.f32 0.0, %v567
      %v569 = vpop.f32.mrb[0].mxu0
      %v570 = vpop.f32.mrb[0].mxu0
      %v571 = vadd.f32 0.0, %v570
      %v572 = vpop.f32.mrb[0].mxu0
      %573 = vmatprep.mubr.bf16.mxu0 0
      %574 = vmatmul.mubr.bf16.gmra.mrb[0].mxu0 %v377
      %v575 = vpop.f32.mrb[0].mxu0
      %v576 = vadd.f32 0.0, %v575
      %v577 = vpop.f32.mrb[0].mxu0
      %v578 = vpop.f32.mrb[0].mxu0
      %v579 = vadd.f32 0.0, %v578
      %v580 = vpop.f32.mrb[0].mxu0
      %581 = vmatprep.mubr.bf16.mxu0 0
      %582 = vmatmul.mubr.bf16.gmra.mrb[0].mxu0 %v378
      %v583 = vpop.f32.mrb[0].mxu0
      %v584 = vadd.f32 0.0, %v583
      %v585 = vpop.f32.mrb[0].mxu0
      %v586 = vpop.f32.mrb[0].mxu0
      %v587 = vadd.f32 0.0, %v586
      %v588 = vpop.f32.mrb[0].mxu0
      %589 = vmatprep.mubr.bf16.mxu0 0
      %590 = vmatmul.mubr.bf16.gmra.mrb[0].mxu0 %v379
      %v591 = vpop.f32.mrb[0].mxu0
      %v592 = vadd.f32 0.0, %v591
      %v593 = vpop.f32.mrb[0].mxu0
      %v594 = vpop.f32.mrb[0].mxu0
      %v595 = vadd.f32 0.0, %v594
      %v596 = vpop.f32.mrb[0].mxu0
      %597 = vmatprep.mubr.bf16.mxu0 0
      %598 = vmatmul.mubr.bf16.gmra.mrb[0].mxu0 %v380
      %v599 = vpop.f32.mrb[0].mxu0
      %v600 = vadd.f32 0.0, %v599
      %v601 = vpop.f32.mrb[0].mxu0
      %v602 = vpop.f32.mrb[0].mxu0
      %v603 = vadd.f32 0.0, %v602
      %v604 = vpop.f32.mrb[0].mxu0
      %605 = vdwg.mxu0
      %606 = vst [vmem:[%s235] sm:$0xff] %v480
      %607 = vst [vmem:[%s235 + $0x8] sm:$0xff] %v483
      %608 = vst [vmem:[%s235 + $0x10] sm:$0xff] %v488
      %609 = vst [vmem:[%s235 + $0x18] sm:$0xff] %v491
      %610 = vst [vmem:[%s235 + $0x20] sm:$0xff] %v496
      %611 = vst [vmem:[%s235 + $0x28] sm:$0xff] %v499
      %612 = vst [vmem:[%s235 + $0x30] sm:$0xff] %v504
      %613 = vst [vmem:[%s235 + $0x38] sm:$0xff] %v507
      %614 = vst [vmem:[%s235 + $0x40] sm:$0xff] %v512
      %615 = vst [vmem:[%s235 + $0x48] sm:$0xff] %v515
      %616 = vst [vmem:[%s235 + $0x50] sm:$0xff] %v520
      %617 = vst [vmem:[%s235 + $0x58] sm:$0xff] %v523
      %618 = vst [vmem:[%s235 + $0x60] sm:$0xff] %v528
      %619 = vst [vmem:[%s235 + $0x68] sm:$0xff] %v531
      %620 = vst [vmem:[%s235 + $0x70] sm:$0xff] %v536
      %621 = vst [vmem:[%s235 + $0x78] sm:$0xff] %v539
      %622 = vst [vmem:[%s235 + $0x80] sm:$0xff] %v544
      %623 = vst [vmem:[%s235 + $0x88] sm:$0xff] %v547
      %624 = vst [vmem:[%s235 + $0x90] sm:$0xff] %v552
      %625 = vst [vmem:[%s235 + $0x98] sm:$0xff] %v555
      %626 = vst [vmem:[%s235 + $0xa0] sm:$0xff] %v560
      %627 = vst [vmem:[%s235 + $0xa8] sm:$0xff] %v563
      %628 = vst [vmem:[%s235 + $0xb0] sm:$0xff] %v568
      %629 = vst [vmem:[%s235 + $0xb8] sm:$0xff] %v571
      %630 = vst [vmem:[%s235 + $0xc0] sm:$0xff] %v576
      %631 = vst [vmem:[%s235 + $0xc8] sm:$0xff] %v579
      %632 = vst [vmem:[%s235 + $0xd0] sm:$0xff] %v584
      %633 = vst [vmem:[%s235 + $0xd8] sm:$0xff] %v587
      %634 = vst [vmem:[%s235 + $0xe0] sm:$0xff] %v592
      %635 = vst [vmem:[%s235 + $0xe8] sm:$0xff] %v595
      %636 = vst [vmem:[%s235 + $0xf0] sm:$0xff] %v600
      %637 = vst [vmem:[%s235 + $0xf8] sm:$0xff] %v603
      %v638 = vld [vmem:[%s241] sm:$0xff]
      %v639 = vadd.f32 %v480, %v483
      %v640 = vadd.f32 %v639, %v488
      %v641 = vadd.f32 %v640, %v491
      %v642 = vadd.f32 %v641, %v496
      %v643 = vadd.f32 %v642, %v499
      %v644 = vadd.f32 %v643, %v504
      %v645 = vadd.f32 %v644, %v507
      %v646 = vadd.f32 %v645, %v512
      %v647 = vadd.f32 %v646, %v515
      %v648 = vadd.f32 %v647, %v520
      %v649 = vadd.f32 %v648, %v523
      %v650 = vadd.f32 %v649, %v528
      %v651 = vadd.f32 %v650, %v531
      %v652 = vadd.f32 %v651, %v536
      %v653 = vadd.f32 %v652, %v539
      %v654 = vadd.f32 %v653, %v544
      %v655 = vadd.f32 %v654, %v547
      %v656 = vadd.f32 %v655, %v552
      %v657 = vadd.f32 %v656, %v555
      %v658 = vadd.f32 %v657, %v560
      %v659 = vadd.f32 %v658, %v563
      %v660 = vadd.f32 %v659, %v568
      %v661 = vadd.f32 %v660, %v571
      %v662 = vadd.f32 %v661, %v576
      %v663 = vadd.f32 %v662, %v579
      %v664 = vadd.f32 %v663, %v584
      %v665 = vadd.f32 %v664, %v587
      %v666 = vadd.f32 %v665, %v592
      %v667 = vadd.f32 %v666, %v595
      %v668 = vadd.f32 %v667, %v600
      %v669 = vadd.f32 %v668, %v603
      %v670 = vrot.slane %v669, 4
      %v671 = vadd.f32 %v669, %v670
      %v672 = vrot.slane %v671, 2
      %v673 = vadd.f32 %v671, %v672
      %v674 = vrot.slane %v673, 1
      %v675 = vadd.f32 %v673, %v674
      %v676 = vadd.f32 %v638, %v675
      %677 = vst [vmem:[%s241] sm:$0xff] %v676
      %v678 = vld [vmem:[%s245] sm:$0xff]
      %v679 = vmul.f32 %v480, %v480
      %v680 = vmul.f32 %v483, %v483
      %v681 = vmul.f32 %v488, %v488
      %v682 = vmul.f32 %v491, %v491
      %v683 = vmul.f32 %v496, %v496
      %v684 = vmul.f32 %v499, %v499
      %v685 = vmul.f32 %v504, %v504
      %v686 = vmul.f32 %v507, %v507
      %v687 = vmul.f32 %v512, %v512
      %v688 = vmul.f32 %v515, %v515
      %v689 = vmul.f32 %v520, %v520
      %v690 = vmul.f32 %v523, %v523
      %v691 = vmul.f32 %v528, %v528
      %v692 = vmul.f32 %v531, %v531
      %v693 = vmul.f32 %v536, %v536
      %v694 = vmul.f32 %v539, %v539
      %v695 = vmul.f32 %v544, %v544
      %v696 = vmul.f32 %v547, %v547
      %v697 = vmul.f32 %v552, %v552
      %v698 = vmul.f32 %v555, %v555
      %v699 = vmul.f32 %v560, %v560
      %v700 = vmul.f32 %v563, %v563
      %v701 = vmul.f32 %v568, %v568
      %v702 = vmul.f32 %v571, %v571
      %v703 = vmul.f32 %v576, %v576
      %v704 = vmul.f32 %v579, %v579
      %v705 = vmul.f32 %v584, %v584
      %v706 = vmul.f32 %v587, %v587
      %v707 = vmul.f32 %v592, %v592
      %v708 = vmul.f32 %v595, %v595
      %v709 = vmul.f32 %v600, %v600
      %v710 = vmul.f32 %v603, %v603
      %v711 = vadd.f32 %v679, %v680
      %v712 = vadd.f32 %v711, %v681
      %v713 = vadd.f32 %v712, %v682
      %v714 = vadd.f32 %v713, %v683
      %v715 = vadd.f32 %v714, %v684
      %v716 = vadd.f32 %v715, %v685
      %v717 = vadd.f32 %v716, %v686
      %v718 = vadd.f32 %v717, %v687
      %v719 = vadd.f32 %v718, %v688
      %v720 = vadd.f32 %v719, %v689
      %v721 = vadd.f32 %v720, %v690
      %v722 = vadd.f32 %v721, %v691
      %v723 = vadd.f32 %v722, %v692
      %v724 = vadd.f32 %v723, %v693
      %v725 = vadd.f32 %v724, %v694
      %v726 = vadd.f32 %v725, %v695
      %v727 = vadd.f32 %v726, %v696
      %v728 = vadd.f32 %v727, %v697
      %v729 = vadd.f32 %v728, %v698
      %v730 = vadd.f32 %v729, %v699
      %v731 = vadd.f32 %v730, %v700
      %v732 = vadd.f32 %v731, %v701
      %v733 = vadd.f32 %v732, %v702
      %v734 = vadd.f32 %v733, %v703
      %v735 = vadd.f32 %v734, %v704
      %v736 = vadd.f32 %v735, %v705
      %v737 = vadd.f32 %v736, %v706
      %v738 = vadd.f32 %v737, %v707
      %v739 = vadd.f32 %v738, %v708
      %v740 = vadd.f32 %v739, %v709
      %v741 = vadd.f32 %v740, %v710
      %v742 = vrot.slane %v741, 4
      %v743 = vadd.f32 %v741, %v742
      %v744 = vrot.slane %v743, 2
      %v745 = vadd.f32 %v743, %v744
      %v746 = vrot.slane %v745, 1
      %v747 = vadd.f32 %v745, %v746
      %v748 = vadd.f32 %v678, %v747
      %749 = vst [vmem:[%s245] sm:$0xff] %v748
      %s750 = sadd.s32 %s20, %s21
      %s751 = smul.u32 32, %s750
      %p752 = scmp.lt.s32.totalorder %s751, 63
      %s753 = scalar_select %p752, %s751, 63
      %s754 = smul.addr %s753, 8
      %s755 = scalar_lea.vmem %s2, %s754
      %p756 = scmp.lt.s32.totalorder %s20, 1
      %s757 = scalar_select %p756, %s20, 1
      %s758 = smul.addr %s757, 8
      %s759 = scalar_lea.vmem %s3, %s758
      %p760 = scmp.lt.s32.totalorder %s20, 1
      %s761 = scalar_select %p760, %s20, 1
      %s762 = smul.addr %s761, 8
      %s763 = scalar_lea.vmem %s4, %s762
      // Predicated region
      $region33: #{basic_conv2d.2} parent=27 // pred_check
        %p764 = pneg %p97
      $region34: #{basic_conv2d.2} parent=27 // pred_check_branch
        %766 = sbr.rel (%p764) target = $region36
      $region35: #{basic_conv2d.2} parent=27 // pred_region
        %s767 = sadd.s32 %s20, %s21
        %s768 = smul.u32 32, %s767
      $region36: #{basic_conv2d.2} parent=27 // pred_fallthru
        _
      // Predicated region
      $region37: #{basic_conv2d.2} parent=27 // pred_check
        %p769 = pneg %p123
      $region38: #{basic_conv2d.2} parent=27 // pred_check_branch
        %771 = sbr.rel (%p769) target = $region40
      $region39: #{basic_conv2d.2} parent=27 // pred_region
        _
      $region40: #{basic_conv2d.2} parent=27 // pred_fallthru
        _
      // Predicated region
      $region41: #{basic_conv2d.2} parent=27 // pred_check
        %p772 = pneg %p149
      $region42: #{basic_conv2d.2} parent=27 // pred_check_branch
        %774 = sbr.rel (%p772) target = $region44
      $region43: #{basic_conv2d.2} parent=27 // pred_region
        _
      $region44: #{basic_conv2d.2} parent=27 // pred_fallthru
        _
    $region28: #{basic_conv2d.2} parent=5 // pred_fallthru
      _
    %p775 = scmp.le.s32.totalorder 2, %s11
    // Predicated region
    $region45: #{basic_conv2d.2} parent=5 // pred_check
      %p776 = pneg %p775
    $region46: #{basic_conv2d.2} parent=5 // pred_check_branch
      %778 = sbr.rel (%p776) target = $region48
    $region47: #{basic_conv2d.2} parent=5 // pred_region
      %s779 = ssub.s32 %s11, 2
      // Predicated region
      $region49: #{basic_conv2d.2} parent=47 // pred_check
        %p780 = pneg %p103
      $region50: #{basic_conv2d.2} parent=47 // pred_check_branch
        %782 = sbr.rel (%p780) target = $region52
      $region51: #{basic_conv2d.2} parent=47 // pred_region
        %s783 = sadd.s32 %s22, %s23
        %s784 = smul.u32 32, %s783
        %p785 = scmp.lt.s32.totalorder %s784, 63
        %s786 = scalar_select %p785, %s784, 63
        %s787 = smul.addr %s786, 8
        %s788 = scalar_lea.vmem %s2, %s787
      $region52: #{basic_conv2d.2} parent=47 // pred_fallthru
        _
      // Predicated region
      $region53: #{basic_conv2d.2} parent=47 // pred_check
        %p789 = pneg %p129
      $region54: #{basic_conv2d.2} parent=47 // pred_check_branch
        %791 = sbr.rel (%p789) target = $region56
      $region55: #{basic_conv2d.2} parent=47 // pred_region
        %p792 = scmp.lt.s32.totalorder %s22, 1
        %s793 = scalar_select %p792, %s22, 1
        %s794 = smul.addr %s793, 8
        %s795 = scalar_lea.vmem %s3, %s794
      $region56: #{basic_conv2d.2} parent=47 // pred_fallthru
        _
      // Predicated region
      $region57: #{basic_conv2d.2} parent=47 // pred_check
        %p796 = pneg %p155
      $region58: #{basic_conv2d.2} parent=47 // pred_check_branch
        %798 = sbr.rel (%p796) target = $region60
      $region59: #{basic_conv2d.2} parent=47 // pred_region
        %p799 = scmp.lt.s32.totalorder %s22, 1
        %s800 = scalar_select %p799, %s22, 1
        %s801 = smul.addr %s800, 8
        %s802 = scalar_lea.vmem %s4, %s801
      $region60: #{basic_conv2d.2} parent=47 // pred_fallthru
        _
    $region48: #{basic_conv2d.2} parent=5 // pred_fallthru
      _
  $region6: #{basic_conv2d.2} parent=0 // loop_footer
    %s15 = sadd.s32 1, %s11
  $region7: #{basic_conv2d.2} parent=0 // loop_footer_branch
    %10 = sbr.rel target = $region3
  $region8: #{basic_conv2d.2} parent=0 // loop_exit
    _

</llo_original>
